<compile_context>
chip_gen: v5e
topology: v5e:2x2
jax: 0.10.0
libtpu: 0.0.40
codegen_flags: <defaults>
</compile_context>

<pallas_src>
import jax
import jax.numpy as jnp
from jax.experimental import pallas as pl
from jax.experimental.pallas import tpu as pltpu

LANE = 128
SUBLANE = 8


def _round_up(x, m):
    return (x + m - 1) // m * m


def _vmem_bytes(tile_n, nfeat, nclass):
    """Rough per-kernel VMEM footprint (lane/sublane padded, incl. buffering)."""
    x_buf = tile_n * _round_up(nfeat, LANE) * 4            # f32 x tile
    out_buf = tile_n * _round_up(nclass, LANE) * 4         # f32 output tile
    w_buf = _round_up(nfeat, 2 * SUBLANE) * _round_up(nclass, LANE) * 2  # bf16 W
    b_buf = SUBLANE * _round_up(nclass, LANE) * 4
    # x and both outputs double-buffered; fused weight/bias single-buffered.
    return 2 * x_buf + 2 * 2 * out_buf + w_buf + b_buf


def dnn_kernel(x_ref, wf_ref, bf_ref, logp_ref, logits_ref):
    # TODO(synk): dropout is identity here (inference semantics); training-mode
    # dropout would use pltpu.prng_seed + pltpu.prng_random_bits masks.
    # x arrives as f32 straight from HBM; cast to bf16 in-kernel so the MXU
    # runs bf16 operands with f32 accumulation.
    x = x_ref[...].astype(jnp.bfloat16)                     # [TILE_N, nfeat]

    # Single fused matmul: fcn2(fcn1(x)) == x @ (W1@W2) + (b1@W2 + b2).
    # Exact because there is no nonlinearity between the two Linear layers.
    logits = jnp.dot(x, wf_ref[...], preferred_element_type=jnp.float32)
    logits = logits + bf_ref[...]                           # f32 [TILE_N, nclass]
    logits_ref[...] = logits                                # f32 (matches PyTorch)

    # Numerically stable log_softmax along the class axis (dim=1).
    m = jnp.max(logits, axis=-1, keepdims=True)
    shifted = logits - m
    lse = jnp.log(jnp.sum(jnp.exp(shifted), axis=-1, keepdims=True))
    logp_ref[...] = shifted - lse


def _dnn_forward(x, w1, b1, w2, b2, *, tile_n=1024):
    """x: [N, nfeat] f32; w1: [nfeat, nhid]; b1: [1, nhid]; w2: [nhid, nclass];
    b2: [1, nclass].  Returns (log_softmax(logits), logits), both f32 [N, nclass]."""
    n, nfeat = x.shape
    nhid, nclass = w2.shape

    # ---- fuse the two Linear layers (once per call, f32 precompute) ----
    w_fused = (w1.astype(jnp.float32) @ w2.astype(jnp.float32)).astype(jnp.bfloat16)
    b_fused = (b1.reshape(1, nhid).astype(jnp.float32) @ w2.astype(jnp.float32)
               + b2.reshape(1, nclass).astype(jnp.float32))  # f32 [1, nclass]

    # ---- tile selection (no batch padding; Pallas handles the ragged tail) ----
    tile_n = min(tile_n, _round_up(n, SUBLANE))
    if pl.cdiv(n, tile_n) < 2 and n > SUBLANE:
        # >= 2 grid steps so ("parallel",) semantics feed both v7x TensorCores.
        tile_n = _round_up(pl.cdiv(n, 2), SUBLANE)
    # Stay inside the smallest scoped-VMEM budget across generations.
    while _vmem_bytes(tile_n, nfeat, nclass) > (24 << 20) and tile_n > SUBLANE:
        tile_n = max(_round_up(tile_n // 2, SUBLANE), SUBLANE)
    grid = (pl.cdiv(n, tile_n),)

    vmem_limit = int(min(_vmem_bytes(tile_n, nfeat, nclass) + (8 << 20), 48 << 20))

    cost = pl.CostEstimate(
        flops=2 * n * nfeat * nclass,
        transcendentals=n * (nclass + 1),        # exp per element + log per row
        bytes_accessed=(x.size * 4 + w_fused.size * 2 + b_fused.size * 4
                        + 2 * n * nclass * 4),
    )

    # Grid-invariant operands: constant index_map, so double-buffering buys
    # nothing -> single-buffer them to halve their resident VMEM footprint.
    resident = pl.Buffered(1)

    logp, logits = pl.pallas_call(
        dnn_kernel,
        out_shape=(
            jax.ShapeDtypeStruct((n, nclass), jnp.float32),   # log_softmax
            jax.ShapeDtypeStruct((n, nclass), jnp.float32),   # raw logits
        ),
        grid=grid,
        in_specs=[
            pl.BlockSpec((tile_n, nfeat), lambda i: (i, 0)),          # x streams
            pl.BlockSpec((nfeat, nclass), lambda i: (0, 0),
                         pipeline_mode=resident),                     # fused W
            pl.BlockSpec((1, nclass), lambda i: (0, 0),
                         pipeline_mode=resident),                     # fused bias
        ],
        out_specs=(
            pl.BlockSpec((tile_n, nclass), lambda i: (i, 0)),
            pl.BlockSpec((tile_n, nclass), lambda i: (i, 0)),
        ),
        compiler_params=pltpu.CompilerParams(
            dimension_semantics=("parallel",),     # megacore sharding on v7x
            vmem_limit_bytes=vmem_limit,
        ),
        cost_estimate=cost,
    )(x, w_fused, b_fused)

    return logp, logits


dnn_forward = jax.jit(_dnn_forward, static_argnames=("tile_n",))


def init_params(key, nfeat, nhid, nclass):
    """Deterministic init mimicking nn.Linear's uniform(-1/sqrt(fan_in), ...)."""
    k1, k2, k3, k4 = jax.random.split(key, 4)
    bound1 = 1.0 / (nfeat ** 0.5)
    bound2 = 1.0 / (nhid ** 0.5)
    # Stored transposed relative to PyTorch: [in_features, out_features].
    w1 = jax.random.uniform(k1, (nfeat, nhid), jnp.float32, -bound1, bound1)
    b1 = jax.random.uniform(k2, (1, nhid), jnp.float32, -bound1, bound1)
    w2 = jax.random.uniform(k3, (nhid, nclass), jnp.float32, -bound2, bound2)
    b2 = jax.random.uniform(k4, (1, nclass), jnp.float32, -bound2, bound2)
    return w1, b1, w2, b2


if __name__ == "__main__":
    key = jax.random.PRNGKey(0)
    kx, kp = jax.random.split(key)

    # Small shapes implied by the forward: x is [batch, nfeat].  batch=16 gives
    # a 2-step batch grid (both v7x TCs) without relying on ragged tail blocks.
    batch, nfeat, nhid, nclass = 16, 32, 64, 16
    x = jax.random.normal(kx, (batch, nfeat), jnp.float32)
    w1, b1, w2, b2 = init_params(kp, nfeat, nhid, nclass)

    log_probs, logits = dnn_forward(x, w1, b1, w2, b2)
    jax.block_until_ready((log_probs, logits))

    # Pure-JAX f32 reference with the two un-fused Linear layers (as in the
    # PyTorch module).  The kernel uses bf16 MXU operands and a fused bf16
    # weight, so compare with a loose tolerance (expected bf16 rounding).
    h_ref = x @ w1 + b1
    logits_ref = h_ref @ w2 + b2
    logp_ref = jax.nn.log_softmax(logits_ref, axis=1)
    assert log_probs.shape == (batch, nclass) and logits.shape == (batch, nclass)
    assert jnp.allclose(logits, logits_ref, atol=5e-2), \
        float(jnp.max(jnp.abs(logits - logits_ref)))
    assert jnp.allclose(log_probs, logp_ref, atol=5e-2), \
        float(jnp.max(jnp.abs(log_probs - logp_ref)))

    print("KERNEL_OK")
</pallas_src>

<mosaic_0001>
module attributes {stable_mosaic.version = 11 : i64} {
  func.func @dnn_kernel(%arg0: i32, %arg1: memref<8x32xf32, #tpu.memory_space<vmem>>, %arg2: memref<32x16xbf16, #tpu.memory_space<vmem>>, %arg3: memref<1x16xf32, #tpu.memory_space<vmem>>, %arg4: memref<8x16xf32, #tpu.memory_space<vmem>>, %arg5: memref<8x16xf32, #tpu.memory_space<vmem>>) attributes {dimension_semantics = [#tpu.dimension_semantics<parallel>], iteration_bounds = array<i64: 2>, scalar_prefetch = 0 : i64, scratch_operands = 0 : i64, tpu.core_type = #tpu.core_type<tc>, window_params = [{transform_indices = @transform_0, window_bounds = array<i64: 8, 32>}, {pipeline_mode = #tpu.pipeline_mode<synchronous>, transform_indices = @transform_1, window_bounds = array<i64: 32, 16>}, {pipeline_mode = #tpu.pipeline_mode<synchronous>, transform_indices = @transform_2, window_bounds = array<i64: 1, 16>}, {transform_indices = @transform_3, window_bounds = array<i64: 8, 16>}, {transform_indices = @transform_4, window_bounds = array<i64: 8, 16>}]} {
    %c0 = arith.constant 0 : index
    %c0_0 = arith.constant 0 : index
    %0 = vector.load %arg1[%c0, %c0_0] : memref<8x32xf32, #tpu.memory_space<vmem>>, vector<8x32xf32>
    %1 = arith.truncf %0 : vector<8x32xf32> to vector<8x32xbf16>
    %c0_1 = arith.constant 0 : index
    %c0_2 = arith.constant 0 : index
    %2 = vector.load %arg2[%c0_1, %c0_2] : memref<32x16xbf16, #tpu.memory_space<vmem>>, vector<32x16xbf16>
    %cst = arith.constant dense<0.000000e+00> : vector<8x16xf32>
    %3 = tpu.matmul %1, %2, %cst {dimension_numbers = #tpu.dot_dimension_numbers<[1], [0], [0], [1], [0, 0, 1, 1], [], []>} : vector<8x32xbf16>, vector<32x16xbf16>, vector<8x16xf32> -> vector<8x16xf32>
    %c0_3 = arith.constant 0 : index
    %c0_4 = arith.constant 0 : index
    %4 = vector.load %arg3[%c0_3, %c0_4] : memref<1x16xf32, #tpu.memory_space<vmem>>, vector<1x16xf32>
    %5 = vector.broadcast %4 : vector<1x16xf32> to vector<8x16xf32>
    %6 = arith.addf %3, %5 : vector<8x16xf32>
    %c0_5 = arith.constant 0 : index
    %c0_6 = arith.constant 0 : index
    %7 = vector.load %arg5[%c0_5, %c0_6] : memref<8x16xf32, #tpu.memory_space<vmem>>, vector<8x16xf32>
    tpu.vector_store %arg5[%c0_5, %c0_6], %6 {strides = array<i32>} : memref<8x16xf32, #tpu.memory_space<vmem>>, vector<8x16xf32>,
    %cst_7 = arith.constant dense<0xFF800000> : vector<8xf32>
    %8 = vector.multi_reduction <maximumf>, %6, %cst_7 [1] : vector<8x16xf32> to vector<8xf32>
    %9 = vector.shape_cast %8 : vector<8xf32> to vector<8x1xf32>
    %10 = vector.broadcast %9 : vector<8x1xf32> to vector<8x16xf32>
    %11 = arith.subf %6, %10 : vector<8x16xf32>
    %12 = math.exp %11 : vector<8x16xf32>
    %cst_8 = arith.constant dense<0.000000e+00> : vector<8xf32>
    %13 = vector.multi_reduction <add>, %12, %cst_8 [1] : vector<8x16xf32> to vector<8xf32>
    %14 = vector.shape_cast %13 : vector<8xf32> to vector<8x1xf32>
    %15 = math.log %14 : vector<8x1xf32>
    %16 = vector.broadcast %15 : vector<8x1xf32> to vector<8x16xf32>
    %17 = arith.subf %11, %16 : vector<8x16xf32>
    %c0_9 = arith.constant 0 : index
    %c0_10 = arith.constant 0 : index
    %18 = vector.load %arg4[%c0_9, %c0_10] : memref<8x16xf32, #tpu.memory_space<vmem>>, vector<8x16xf32>
    tpu.vector_store %arg4[%c0_9, %c0_10], %17 {strides = array<i32>} : memref<8x16xf32, #tpu.memory_space<vmem>>, vector<8x16xf32>,
    return
  }
  func.func @transform_0(%arg0: i32) -> (i32, i32) {
    %c0_i32 = arith.constant 0 : i32
    %c0_i32_0 = arith.constant 0 : i32
    return %arg0, %c0_i32 : i32, i32
  }
  func.func @transform_1(%arg0: i32) -> (i32, i32) {
    %c0_i32 = arith.constant 0 : i32
    %c0_i32_0 = arith.constant 0 : i32
    %c0_i32_1 = arith.constant 0 : i32
    return %c0_i32, %c0_i32_0 : i32, i32
  }
  func.func @transform_2(%arg0: i32) -> (i32, i32) {
    %c0_i32 = arith.constant 0 : i32
    %c0_i32_0 = arith.constant 0 : i32
    %c0_i32_1 = arith.constant 0 : i32
    return %c0_i32, %c0_i32_0 : i32, i32
  }
  func.func @transform_3(%arg0: i32) -> (i32, i32) {
    %c0_i32 = arith.constant 0 : i32
    %c0_i32_0 = arith.constant 0 : i32
    return %arg0, %c0_i32 : i32, i32
  }
  func.func @transform_4(%arg0: i32) -> (i32, i32) {
    %c0_i32 = arith.constant 0 : i32
    %c0_i32_0 = arith.constant 0 : i32
    return %arg0, %c0_i32 : i32, i32
  }
}

</mosaic_0001>

<llo_original>
// kernel: _dnn_forward.1
$region0: #{_dnn_forward.1}
  #allocation0 [shape = 'u32[]', space=smem, size = 0x4, offset = 0x4, fixed_abs, tag = 'smem constant byte address 0x4 - core index']
  #allocation1 [shape = 'u32[72,128]{1,0:T(1,128)}', space=vmem, size = 0x9000, scoped, tag = 'internal scratch']
  %s0 = inlined_call_operand.vmem [shape: f32[16,32], index: 0, kind: input, shape index: {}]
  %s1 = inlined_call_operand.vmem [shape: bf16[32,16], index: 1, kind: input, shape index: {}]
  %s2 = inlined_call_operand.vmem [shape: f32[1,16], index: 2, kind: input, shape index: {}]
  %s3 = inlined_call_operand.hbm [shape: f32[16,16], index: 3, kind: output, shape index: {0}]
  %s4 = inlined_call_operand.hbm [shape: f32[16,16], index: 4, kind: output, shape index: {1}]
  %5 = xla_tuple %s3, %s4
  %s6 = sld [smem:[#allocation0]]
  $region53: #{_dnn_forward.1} parent=0
    _
  %s8 = ssub.s32 1, %s6
  %s9 = scalar_select 0, %s8, %s6
  $region1: #{_dnn_forward.1} parent=0
    #allocation2 [shape = 'u8[8192]{0}', space=vmem, size = 0x2000, scoped, tag = 'output window, operand 0']
    #allocation3 [shape = 's32[2]{0}', space=sflag, size = 0x8, scoped, tag = 'scoped memory for _dnn_forward.1']
    #allocation4 [shape = 'u8[8192]{0}', space=vmem, size = 0x2000, scoped, tag = 'output window, operand 1']
    #allocation5 [shape = 's32[2]{0}', space=sflag, size = 0x8, scoped, tag = 'scoped memory for _dnn_forward.1']
    %10 = vsyncpa [#allocation3], 0
    %s11 = scalar_lea.sflag [#allocation3], 1
    %12 = vsyncpa %s11, 0
    %13 = vsyncpa [#allocation5], 0
    %s14 = scalar_lea.sflag [#allocation5], 1
    %15 = vsyncpa %s14, 0
    loop: start=0, step=1, limit=4
    $region2: #{_dnn_forward.1} parent=1 // loop_pre_header
      _
    $region3: #{_dnn_forward.1} parent=1 // loop_header
      %s17 = sphi 0, %s21
      %p18 = scmp.ge.s32.totalorder %s17, 4
      %s27 = sphi 0, %s29
      %s30 = sphi 0, %s27
      %s31 = sphi 0, %s30
      %s47 = sphi 0, %s31
      %s51 = sphi 0, %s51
      %s53 = sphi 0, %s51
      %s54 = sphi 0, %s53
      %s68 = sphi 0, %s54
      %s72 = sphi 0, %s72
      %s74 = sphi 0, %s72
      %s75 = sphi 0, %s74
      %s89 = sphi 0, %s75
      %s95 = sphi 0, %s97
      %s98 = sphi 0, %s95
      %s99 = sphi 0, %s98
      %s115 = sphi 0, %s99
      %s121 = sphi 0, %s123
      %s124 = sphi 0, %s121
      %s125 = sphi 0, %s124
      %s141 = sphi 0, %s125
    $region4: #{_dnn_forward.1} parent=1 // loop_header_branch
      %20 = sbr.rel (%p18) target = $region8
    $region5: #{_dnn_forward.1} parent=1 // loop_body
      %s22 = ssub.s32 %s17, 1
      %s23 = ssub.s32 %s17, 2
      %s24 = sadd.s32 %s17, 1
      %s25 = ssub.s32 %s17, %s24
      %p26 = scmp.eq.s32.totalorder %s25, 0
      %s28 = sadd.s32 %s27, 1
      %s29 = scalar_select %p26, %s27, %s28
      %p32 = pneg %p26
      %p33 = scmp.eq.s32.totalorder %s17, 1
      %p34 = por %p32, %p33
      %p35 = scmp.ne.s32.totalorder %s27, %s30
      %p36 = scmp.eq.s32.totalorder %s17, 0
      %p37 = por %p35, %p36
      %p38 = scmp.ne.s32.totalorder %s27, %s30
      %p39 = scmp.eq.s32.totalorder %s22, 1
      %p40 = por %p38, %p39
      %p41 = scmp.ne.s32.totalorder %s30, %s31
      %p42 = scmp.eq.s32.totalorder %s22, 0
      %p43 = por %p41, %p42
      %p44 = scmp.ne.s32.totalorder %s30, %s31
      %p45 = scmp.eq.s32.totalorder %s23, 1
      %p46 = por %p44, %p45
      %p48 = scmp.ne.s32.totalorder %s31, %s47
      %p49 = scmp.eq.s32.totalorder %s23, 0
      %p50 = por %p48, %p49
      %s52 = sadd.s32 %s51, 1
      %p55 = scmp.eq.s32.totalorder %s17, 1
      %p56 = scmp.ne.s32.totalorder %s51, %s53
      %p57 = scmp.eq.s32.totalorder %s17, 0
      %p58 = por %p56, %p57
      %p59 = scmp.ne.s32.totalorder %s51, %s53
      %p60 = scmp.eq.s32.totalorder %s22, 1
      %p61 = por %p59, %p60
      %p62 = scmp.ne.s32.totalorder %s53, %s54
      %p63 = scmp.eq.s32.totalorder %s22, 0
      %p64 = por %p62, %p63
      %p65 = scmp.ne.s32.totalorder %s53, %s54
      %p66 = scmp.eq.s32.totalorder %s23, 1
      %p67 = por %p65, %p66
      %p69 = scmp.ne.s32.totalorder %s54, %s68
      %p70 = scmp.eq.s32.totalorder %s23, 0
      %p71 = por %p69, %p70
      %s73 = sadd.s32 %s72, 1
      %p76 = scmp.eq.s32.totalorder %s17, 1
      %p77 = scmp.ne.s32.totalorder %s72, %s74
      %p78 = scmp.eq.s32.totalorder %s17, 0
      %p79 = por %p77, %p78
      %p80 = scmp.ne.s32.totalorder %s72, %s74
      %p81 = scmp.eq.s32.totalorder %s22, 1
      %p82 = por %p80, %p81
      %p83 = scmp.ne.s32.totalorder %s74, %s75
      %p84 = scmp.eq.s32.totalorder %s22, 0
      %p85 = por %p83, %p84
      %p86 = scmp.ne.s32.totalorder %s74, %s75
      %p87 = scmp.eq.s32.totalorder %s23, 1
      %p88 = por %p86, %p87
      %p90 = scmp.ne.s32.totalorder %s75, %s89
      %p91 = scmp.eq.s32.totalorder %s23, 0
      %p92 = por %p90, %p91
      %s93 = ssub.s32 %s17, %s24
      %p94 = scmp.eq.s32.totalorder %s93, 0
      %s96 = sadd.s32 %s95, 1
      %s97 = scalar_select %p94, %s95, %s96
      %p100 = pneg %p94
      %p101 = scmp.eq.s32.totalorder %s17, 1
      %p102 = por %p100, %p101
      %p103 = scmp.ne.s32.totalorder %s95, %s98
      %p104 = scmp.eq.s32.totalorder %s17, 0
      %p105 = por %p103, %p104
      %p106 = scmp.ne.s32.totalorder %s95, %s98
      %p107 = scmp.eq.s32.totalorder %s22, 1
      %p108 = por %p106, %p107
      %p109 = scmp.ne.s32.totalorder %s98, %s99
      %p110 = scmp.eq.s32.totalorder %s22, 0
      %p111 = por %p109, %p110
      %p112 = scmp.ne.s32.totalorder %s98, %s99
      %p113 = scmp.eq.s32.totalorder %s23, 1
      %p114 = por %p112, %p113
      %p116 = scmp.ne.s32.totalorder %s99, %s115
      %p117 = scmp.eq.s32.totalorder %s23, 0
      %p118 = por %p116, %p117
      %s119 = ssub.s32 %s17, %s24
      %p120 = scmp.eq.s32.totalorder %s119, 0
      %s122 = sadd.s32 %s121, 1
      %s123 = scalar_select %p120, %s121, %s122
      %p126 = pneg %p120
      %p127 = scmp.eq.s32.totalorder %s17, 1
      %p128 = por %p126, %p127
      %p129 = scmp.ne.s32.totalorder %s121, %s124
      %p130 = scmp.eq.s32.totalorder %s17, 0
      %p131 = por %p129, %p130
      %p132 = scmp.ne.s32.totalorder %s121, %s124
      %p133 = scmp.eq.s32.totalorder %s22, 1
      %p134 = por %p132, %p133
      %p135 = scmp.ne.s32.totalorder %s124, %s125
      %p136 = scmp.eq.s32.totalorder %s22, 0
      %p137 = por %p135, %p136
      %p138 = scmp.ne.s32.totalorder %s124, %s125
      %p139 = scmp.eq.s32.totalorder %s23, 1
      %p140 = por %p138, %p139
      %p142 = scmp.ne.s32.totalorder %s125, %s141
      %p143 = scmp.eq.s32.totalorder %s23, 0
      %p144 = por %p142, %p143
      %p145 = scmp.le.s32.totalorder 1, %s17
      %p146 = scmp.lt.s32.totalorder %s17, 3
      %p147 = pnand %p145, %p146
      %p148 = pneg %p147
      // Predicated region
      $region9: #{_dnn_forward.1} parent=5 // pred_check
        _
      $region10: #{_dnn_forward.1} parent=5 // pred_check_branch
        %150 = sbr.rel (%p147) target = $region12
      $region11: #{_dnn_forward.1} parent=5 // pred_region
        %s151 = ssub.s32 %s17, 1
        // Predicated region
        $region13: #{_dnn_forward.1} parent=11 // pred_check
          %p152 = pneg %p64
        $region14: #{_dnn_forward.1} parent=11 // pred_check_branch
          %154 = sbr.rel (%p152) target = $region16
        $region15: #{_dnn_forward.1} parent=11 // pred_region
          _
        $region16: #{_dnn_forward.1} parent=11 // pred_fallthru
          _
        // Predicated region
        $region17: #{_dnn_forward.1} parent=11 // pred_check
          %p155 = pneg %p85
        $region18: #{_dnn_forward.1} parent=11 // pred_check_branch
          %157 = sbr.rel (%p155) target = $region20
        $region19: #{_dnn_forward.1} parent=11 // pred_region
          _
        $region20: #{_dnn_forward.1} parent=11 // pred_fallthru
          _
      $region12: #{_dnn_forward.1} parent=5 // pred_fallthru
        _
      %p158 = scmp.lt.s32.totalorder %s17, 2
      // Predicated region
      $region21: #{_dnn_forward.1} parent=5 // pred_check
        %p159 = pneg %p158
      $region22: #{_dnn_forward.1} parent=5 // pred_check_branch
        %161 = sbr.rel (%p159) target = $region24
      $region23: #{_dnn_forward.1} parent=5 // pred_region
        // Predicated region
        $region25: #{_dnn_forward.1} parent=23 // pred_check
          %p162 = pneg %p37
        $region26: #{_dnn_forward.1} parent=23 // pred_check_branch
          %164 = sbr.rel (%p162) target = $region28
        $region27: #{_dnn_forward.1} parent=23 // pred_region
          %p165 = scmp.lt.s32.totalorder %s17, 1
          %s166 = scalar_select %p165, %s17, 1
          %s167 = smul.addr %s166, 8
          %s168 = scalar_lea.vmem %s0, %s167
        $region28: #{_dnn_forward.1} parent=23 // pred_fallthru
          _
      $region24: #{_dnn_forward.1} parent=5 // pred_fallthru
        _
      %p169 = scmp.le.s32.totalorder 1, %s17
      %p170 = scmp.lt.s32.totalorder %s17, 3
      %p171 = pnand %p169, %p170
      %p172 = pneg %p171
      // Predicated region
      $region29: #{_dnn_forward.1} parent=5 // pred_check
        _
      $region30: #{_dnn_forward.1} parent=5 // pred_check_branch
        %174 = sbr.rel (%p171) target = $region32
      $region31: #{_dnn_forward.1} parent=5 // pred_region
        %s175 = ssub.s32 %s17, 1
        %p176 = scmp.lt.s32.totalorder %s22, 1
        %s177 = scalar_select %p176, %s22, 1
        %s178 = smul.addr %s177, 8
        %s179 = scalar_lea.vmem %s0, %s178
        %p180 = pneg %p43
        %p181 = pneg %p40
        %p182 = pneg %p64
        %p183 = pneg %p61
        %p184 = pneg %p85
        %p185 = pneg %p82
        %p186 = pneg %p111
        %p187 = pneg %p108
        %s188 = sand.u32 %s98, 1
        %s189 = scalar_lea.sflag [#allocation3], %s188
        %s190 = sand.u32 %s98, 1
        %s191 = smul.addr %s190, 8
        %s192 = scalar_lea.vmem [#allocation2], %s191
        %p193 = pneg %p137
        %p194 = pneg %p134
        %s195 = sand.u32 %s124, 1
        %s196 = scalar_lea.sflag [#allocation5], %s195
        %s197 = sand.u32 %s124, 1
        %s198 = smul.addr %s197, 8
        %s199 = scalar_lea.vmem [#allocation4], %s198
        %p200 = scmp.lt.s32.totalorder %s22, 1
        %s201 = scalar_select %p200, %s22, 1
        %s202 = smul.addr %s201, 8
        %s203 = scalar_lea.vmem %s0, %s202
        %v205 = vld [vmem:[%s203] sm:$0xff]
        %v206 = vpack.c.bf16 %v205, %v205
        %v207 = vld [vmem:[%s1] sm:$0xf]
        %v208 = vld [vmem:[%s1 + $0x4] sm:$0xf]
        %v209 = vld [vmem:[%s1 + $0x8] sm:$0xf]
        %v210 = vld [vmem:[%s1 + $0xc] sm:$0xf]
        %v211 = vld [vmem:[%s2] sm:$0x1]
        %v213 = vperm.slane %v211, 0
        %v219 = vunpack.c.l.b16 %v207
        %v220 = vunpack.c.l.b16 %v208
        %v221 = vunpack.c.l.b16 %v209
        %v222 = vunpack.c.l.b16 %v210
        %v223 = vpack.c.b16 %v220, %v219
        %v224 = vpack.c.b16 %v222, %v221
        %vm227 = vcmask 261120
        %v229 = vsel %vm227, %v206, 0
        %231 = vmatpush.bf16.msra.mxu0 0
        %232 = vmatpush.bf16.msra.mxu0 0
        %233 = vmatpush.bf16.msra.mxu0 0
        %234 = vmatpush.bf16.msra.mxu0 0
        %235 = vmatpush.bf16.msra.mxu0 0
        %236 = vmatpush.bf16.msra.mxu0 0
        %237 = vmatpush.bf16.msra.mxu0 %v224
        %238 = vmatpush.bf16.msra.mxu0 %v223
        %239 = vmatmul.bf16.gmra.mxu0 %v229
        %v240 = vpop.f32.mrf.mxu0
        %v241 = vadd.f32 %v213, %v240
        %v242 = vpop.f32.mrf.mxu0
        %243 = vdwg.mxu0
        %vm244 = vcmask 130048
        %245 = vst.msk [vmem:[%s199] sm:$0xff] %vm244, %v241
        %v246 = vsel %vm244, %v241, -inf
        %247 = vmax.xlane.f32.xlu0 %v246
        %v248 = vpop.xlane.xlu0 %247
        %v249 = vsub.f32 %v241, %v248
        %v250 = vmul.f32 %v249, 1.442695
        %v251 = vpow.pop %v250
        %v252 = vsel %vm244, %v251, 0.0
        %253 = vadd.xlane.f32.xlu0 %v252
        %v254 = vpop.xlane.xlu0 %253
        %v255 = vlog2.pop %v254
        %v256 = vmul.f32 %v255, 0.6931472
        %v257 = vsub.f32 %v249, %v256
        %258 = vst.msk [vmem:[%s192] sm:$0xff] %vm244, %v257
        %s259 = sand.u32 %s98, 1
        %s260 = scalar_lea.sflag [#allocation3], %s259
        %s261 = sand.u32 %s98, 1
        %s262 = smul.addr %s261, 8
        %s263 = scalar_lea.vmem [#allocation2], %s262
        %s264 = sand.u32 %s124, 1
        %s265 = scalar_lea.sflag [#allocation5], %s264
        %s266 = sand.u32 %s124, 1
        %s267 = smul.addr %s266, 8
        %s268 = scalar_lea.vmem [#allocation4], %s267
        // Predicated region
        $region33: #{_dnn_forward.1} parent=31 // pred_check
          %p269 = pneg %p108
        $region34: #{_dnn_forward.1} parent=31 // pred_check_branch
          %271 = sbr.rel (%p269) target = $region36
        $region35: #{_dnn_forward.1} parent=31 // pred_region
          %273 = vsyncadd %s260, 0
          %s274 = smul.addr %s22, 8
          %s275 = scalar_lea.hbm %s3, %s274
          %s277 = sshll.u32 %s263, 4
          %s278 = int_to_ptr.vmem [resolvable:$true] %s277
          %s279 = sshll.u32 %s275, 4
          %s280 = int_to_ptr.hbm [resolvable:$true] %s279
          %282 = dma.vmem_to_hbm [thread:$0]  %s278, 128, %s280, %s260
        $region36: #{_dnn_forward.1} parent=31 // pred_fallthru
          _
        // Predicated region
        $region37: #{_dnn_forward.1} parent=31 // pred_check
          %p283 = pneg %p134
        $region38: #{_dnn_forward.1} parent=31 // pred_check_branch
          %285 = sbr.rel (%p283) target = $region40
        $region39: #{_dnn_forward.1} parent=31 // pred_region
          %287 = vsyncadd %s265, 0
          %s288 = smul.addr %s22, 8
          %s289 = scalar_lea.hbm %s4, %s288
          %s291 = sshll.u32 %s268, 4
          %s292 = int_to_ptr.vmem [resolvable:$true] %s291
          %s293 = sshll.u32 %s289, 4
          %s294 = int_to_ptr.hbm [resolvable:$true] %s293
          %296 = dma.vmem_to_hbm [thread:$0]  %s292, 128, %s294, %s265
        $region40: #{_dnn_forward.1} parent=31 // pred_fallthru
          _
      $region32: #{_dnn_forward.1} parent=5 // pred_fallthru
        _
      %p297 = scmp.le.s32.totalorder 2, %s17
      // Predicated region
      $region41: #{_dnn_forward.1} parent=5 // pred_check
        %p298 = pneg %p297
      $region42: #{_dnn_forward.1} parent=5 // pred_check_branch
        %300 = sbr.rel (%p298) target = $region44
      $region43: #{_dnn_forward.1} parent=5 // pred_region
        %s301 = ssub.s32 %s17, 2
        // Predicated region
        $region45: #{_dnn_forward.1} parent=43 // pred_check
          %p302 = pneg %p114
        $region46: #{_dnn_forward.1} parent=43 // pred_check_branch
          %304 = sbr.rel (%p302) target = $region48
        $region47: #{_dnn_forward.1} parent=43 // pred_region
          %s305 = sand.u32 %s99, 1
          %s306 = scalar_lea.sflag [#allocation3], %s305
          %s307 = sand.u32 %s99, 1
          %s308 = smul.addr %s307, 8
          %s309 = scalar_lea.vmem [#allocation2], %s308
          %311 = dma.done %s306, 128
        $region48: #{_dnn_forward.1} parent=43 // pred_fallthru
          _
        // Predicated region
        $region49: #{_dnn_forward.1} parent=43 // pred_check
          %p312 = pneg %p140
        $region50: #{_dnn_forward.1} parent=43 // pred_check_branch
          %314 = sbr.rel (%p312) target = $region52
        $region51: #{_dnn_forward.1} parent=43 // pred_region
          %s315 = sand.u32 %s125, 1
          %s316 = scalar_lea.sflag [#allocation5], %s315
          %s317 = sand.u32 %s125, 1
          %s318 = smul.addr %s317, 8
          %s319 = scalar_lea.vmem [#allocation4], %s318
          %321 = dma.done %s316, 128
        $region52: #{_dnn_forward.1} parent=43 // pred_fallthru
          _
      $region44: #{_dnn_forward.1} parent=5 // pred_fallthru
        _
    $region6: #{_dnn_forward.1} parent=1 // loop_footer
      %s21 = sadd.s32 1, %s17
    $region7: #{_dnn_forward.1} parent=1 // loop_footer_branch
      %16 = sbr.rel target = $region3
    $region8: #{_dnn_forward.1} parent=1 // loop_exit
      _
    %322 = vsyncpa [#allocation3], 1
    %s323 = scalar_lea.sflag [#allocation3], 1
    %324 = vsyncpa %s323, 1
    %325 = vsyncpa [#allocation5], 1
    %s326 = scalar_lea.sflag [#allocation5], 1
    %327 = vsyncpa %s326, 1

</llo_original>
